<compile_context>
chip_gen: v6e
topology: v6e:2x2x1
jax: 0.10.0
libtpu: 0.0.40
codegen_flags: <defaults>
</compile_context>

<pallas_src>
import functools

import jax
import jax.numpy as jnp
import numpy as np
from jax.experimental import pallas as pl
from jax.experimental.pallas import tpu as pltpu


# ----------------------------------------------------------------------------
# pltpu.roll direction probe (so depthwise-conv shifts are convention-proof)
# ----------------------------------------------------------------------------
def _roll_probe_kernel(x_ref, o_ref):
    o_ref[...] = pltpu.roll(x_ref[...], 1, 1)


@functools.lru_cache(maxsize=1)
def _pltpu_roll_like_jnp():
    """Returns True iff pltpu.roll(x, s, ax) == jnp.roll(x, s, ax)."""
    x = jnp.tile(jnp.arange(128, dtype=jnp.float32)[None, :], (8, 1))
    y = pl.pallas_call(
        _roll_probe_kernel,
        out_shape=jax.ShapeDtypeStruct((8, 128), jnp.float32),
    )(x)
    return bool(float(np.asarray(y)[0, 0]) == 127.0)


def _shift_lanes(x, off, roll_like_jnp):
    """result[:, s] = x[:, (s + off) % n] with a static Python-int offset."""
    n = x.shape[-1]
    if off % n == 0:
        return x
    shift = (-off) % n if roll_like_jnp else off % n
    return pltpu.roll(x, shift, 1)


@functools.lru_cache(maxsize=1)
def _vmem_limit_bytes():
    """~75% of physical VMEM, capped at 100 MiB (=> ~96 MiB v5e/v6e, ~48 MiB v7x)."""
    try:
        cap = int(pltpu.get_tpu_info().vmem_capacity_bytes)
    except Exception:
        cap = 64 * 1024 * 1024          # conservative fallback (v7x physical)
    return int(min(100 * 1024 * 1024, cap - cap // 4))


# ----------------------------------------------------------------------------
# Depthwise 3x3 conv (padding=1) on a channels-major (Cb, H*W) slab, in VMEM
# ----------------------------------------------------------------------------
def _dwconv3x3_flat(x, dww, H, W, roll_like_jnp):
    """dww: (9, Cb, 1) per-channel taps, tap index t = ky*3 + kx (dy=ky-1, dx=kx-1).

    Boundary masks come from an in-kernel iota (no HBM mask table), the centre tap is
    unmasked, and shifts are decomposed into 2 row rolls (+-W) + 2 unit rolls (+-1) by
    combining the three dy taps of each dx column before shifting.
    """
    HW = H * W
    dt = x.dtype
    lane = jax.lax.broadcasted_iota(jnp.int32, (1, HW), 1)
    col = lane % W
    rmask_up = (lane >= W).astype(dt)          # h-1 >= 0
    rmask_dn = (lane < HW - W).astype(dt)      # h+1 <= H-1
    cmask_l = (col >= 1).astype(dt)            # w-1 >= 0
    cmask_r = (col <= W - 2).astype(dt)        # w+1 <= W-1

    x_up = _shift_lanes(x, -W, roll_like_jnp) * rmask_up    # x[c, h-1, w]
    x_dn = _shift_lanes(x, +W, roll_like_jnp) * rmask_dn    # x[c, h+1, w]

    def col_sum(kx):                   # combine dy = -1, 0, +1 taps of column kx
        return x_up * dww[kx] + x * dww[3 + kx] + x_dn * dww[6 + kx]

    acc = col_sum(1)                                                      # dx = 0
    acc = acc + _shift_lanes(col_sum(0), -1, roll_like_jnp) * cmask_l     # dx = -1
    acc = acc + _shift_lanes(col_sum(2), +1, roll_like_jnp) * cmask_r     # dx = +1
    return acc


# ----------------------------------------------------------------------------
# LayerNorm (WithBias, over channels) + the module's to_4d "plain reshape" quirk.
# Left to one fused XLA pass: the quirk is a flat reinterpretation of y^T, i.e. pure
# lane<->sublane data movement that Mosaic reshapes don't express cleanly; XLA fuses
# the LN arithmetic, the shuffle and the bf16 down-cast into a single HBM R+W.
# ----------------------------------------------------------------------------
def _norm_and_shuffle(xf, w, b):
    B, C, HW = xf.shape
    mu = jnp.mean(xf, axis=1, keepdims=True)
    var = jnp.mean(jnp.square(xf - mu), axis=1, keepdims=True)
    y = (xf - mu) * jax.lax.rsqrt(var + 1e-5) * w[None, :, None] + b[None, :, None]
    # to_4d quirk: plain reshape of the (B, HW, C) LN output back into (B, C, HW).
    z = y.transpose(0, 2, 1).reshape(B, C, HW)
    return z.astype(jnp.bfloat16)   # consumed only as a bf16 MXU operand in the kernels


# ----------------------------------------------------------------------------
# Fused attention branch: 1x1 qkv -> dw3x3 -> channel attention -> 1x1 -> +residual
# ----------------------------------------------------------------------------
def _attn_kernel(z_ref, xr_ref, wqkv_ref, dww_ref, temp_ref, wproj_ref, o_ref, *,
                 C, H, W, num_heads, roll_like_jnp):
    f32, bf16 = jnp.float32, jnp.bfloat16
    d = C // num_heads
    z = z_ref[...]                                                      # (C, HW) bf16
    temp = temp_ref[...]                                                # (C, 1)  f32

    qkv = jnp.dot(wqkv_ref[...], z, preferred_element_type=f32)        # (3C, HW) f32
    qkv = _dwconv3x3_flat(qkv, dww_ref[...], H, W, roll_like_jnp)

    q, k, v = qkv[0:C, :], qkv[C:2 * C, :], qkv[2 * C:3 * C, :]
    # F.normalize(dim=-1): per-channel-row L2 norm over the spatial axis, eps=1e-12
    qn = q / jnp.maximum(jnp.sqrt(jnp.sum(q * q, axis=1, keepdims=True)), 1e-12)
    kn = k / jnp.maximum(jnp.sqrt(jnp.sum(k * k, axis=1, keepdims=True)), 1e-12)

    if C <= 128:
        # All heads in one (C, C) MXU tile; cross-head entries are killed by a 0/1
        # block-diagonal mask applied AFTER exp (the full-row max is a valid stabilizer).
        scores = jax.lax.dot_general(qn.astype(bf16), kn.astype(bf16),
                                     (((1,), (1,)), ((), ())),
                                     preferred_element_type=f32)        # (C, C)
        scores = scores * temp
        scores = scores - jnp.max(scores, axis=1, keepdims=True)
        hmask = (jax.lax.broadcasted_iota(jnp.int32, (C, C), 0) // d ==
                 jax.lax.broadcasted_iota(jnp.int32, (C, C), 1) // d).astype(f32)
        probs = jnp.exp(scores) * hmask
        probs = probs * pl.reciprocal(jnp.sum(probs, axis=1, keepdims=True), approx=True)
        out = jnp.dot(probs.astype(bf16), v.astype(bf16), preferred_element_type=f32)
    else:
        # Guard for C > one MXU tile: per-head contractions avoid num_heads x extra FLOPs.
        outs = []
        for h in range(num_heads):
            sl = slice(h * d, (h + 1) * d)
            sc = jax.lax.dot_general(qn[sl].astype(bf16), kn[sl].astype(bf16),
                                     (((1,), (1,)), ((), ())),
                                     preferred_element_type=f32)        # (d, d)
            sc = sc * temp[sl, :]
            sc = sc - jnp.max(sc, axis=1, keepdims=True)
            ph = jnp.exp(sc)
            ph = ph * pl.reciprocal(jnp.sum(ph, axis=1, keepdims=True), approx=True)
            outs.append(jnp.dot(ph.astype(bf16), v[sl].astype(bf16),
                                preferred_element_type=f32))
        out = jnp.concatenate(outs, axis=0)

    # project_out 1x1 conv + residual, single lane-dense store
    o = jnp.dot(wproj_ref[...], out.astype(bf16), preferred_element_type=f32) + xr_ref[...]
    o_ref[...] = o.astype(o_ref.dtype)


def attention_branch(z, xres, p, num_heads, H, W):
    B, C, HW = xres.shape
    d = C // num_heads
    temp_row = jnp.repeat(p["temperature"].astype(jnp.float32), d).reshape(C, 1)
    dw9 = p["qkv_dw_w"].T.reshape(9, 3 * C, 1)               # (9, 3C, 1), tap = ky*3+kx

    kernel = functools.partial(_attn_kernel, C=C, H=H, W=W, num_heads=num_heads,
                               roll_like_jnp=_pltpu_roll_like_jnp())
    return pl.pallas_call(
        kernel,
        out_shape=jax.ShapeDtypeStruct((B, C, HW), xres.dtype),
        grid=(B,),
        in_specs=[
            pl.BlockSpec((None, C, HW), lambda i: (i, 0, 0)),      # z (bf16, shuffled LN)
            pl.BlockSpec((None, C, HW), lambda i: (i, 0, 0)),      # residual (f32)
            pl.BlockSpec((3 * C, C), lambda i: (0, 0)),            # W_qkv (bf16)
            pl.BlockSpec((9, 3 * C, 1), lambda i: (0, 0, 0)),      # dw taps (f32)
            pl.BlockSpec((C, 1), lambda i: (0, 0)),                # per-row temperature
            pl.BlockSpec((C, C), lambda i: (0, 0)),                # W_proj (bf16)
        ],
        out_specs=pl.BlockSpec((None, C, HW), lambda i: (i, 0, 0)),
        compiler_params=pltpu.CompilerParams(
            dimension_semantics=("parallel",),
            vmem_limit_bytes=_vmem_limit_bytes()),
    )(z, xres, p["qkv_w"].astype(jnp.bfloat16), dw9, temp_row,
      p["proj_w"].astype(jnp.bfloat16))


# ----------------------------------------------------------------------------
# Fused GDFN branch: 1x1 project_in -> dw3x3 -> gated GELU -> 1x1 -> +residual
# Hidden dimension is chunked in-kernel so the (2*hidden, HW) slab never has to be
# resident at once (v7x 64 MiB VMEM).
# ----------------------------------------------------------------------------
def _pick_chunk(hidden, target=256):
    if hidden <= target:
        return hidden
    for c in range(target, 7, -1):
        if hidden % c == 0:
            return c
    return hidden


def _ffn_kernel(z_ref, xr_ref, win_ref, dww_ref, wout_ref, o_ref, *,
                hidden, chunk, H, W, roll_like_jnp):
    f32, bf16 = jnp.float32, jnp.bfloat16
    z = z_ref[...]                               # (C, HW) bf16
    win = win_ref[...]                           # (2*hidden, C) bf16
    wout = wout_ref[...]                         # (C, hidden)  bf16
    dww = dww_ref[...]                           # (9, 2*hidden, 1) f32
    acc = xr_ref[...]                            # (C, HW) f32 residual accumulator
    c0 = 0.7978845608028654                      # sqrt(2/pi)

    for lo in range(0, hidden, chunk):
        h1 = jnp.dot(win[lo:lo + chunk, :], z, preferred_element_type=f32)
        h2 = jnp.dot(win[hidden + lo:hidden + lo + chunk, :], z,
                     preferred_element_type=f32)
        h1 = _dwconv3x3_flat(h1, dww[:, lo:lo + chunk, :], H, W, roll_like_jnp)
        h2 = _dwconv3x3_flat(h2, dww[:, hidden + lo:hidden + lo + chunk, :],
                             H, W, roll_like_jnp)
        # TODO(synk): F.gelu default is the exact erf GELU; tanh approximation used
        # in-kernel (erf has no reliable Mosaic lowering), ~1e-3 max deviation.
        g = 0.5 * h1 * (1.0 + jnp.tanh(c0 * (h1 + 0.044715 * h1 * h1 * h1))) * h2
        acc = acc + jnp.dot(wout[:, lo:lo + chunk], g.astype(bf16),
                            preferred_element_type=f32)

    o_ref[...] = acc.astype(o_ref.dtype)


def ffn_branch(z, xres, p, H, W):
    B, C, HW = xres.shape
    hidden = p["ffn_out_w"].shape[1]
    chunk = _pick_chunk(hidden)
    dw9 = p["ffn_dw_w"].T.reshape(9, 2 * hidden, 1)

    kernel = functools.partial(_ffn_kernel, hidden=hidden, chunk=chunk, H=H, W=W,
                               roll_like_jnp=_pltpu_roll_like_jnp())
    return pl.pallas_call(
        kernel,
        out_shape=jax.ShapeDtypeStruct((B, C, HW), xres.dtype),
        grid=(B,),
        in_specs=[
            pl.BlockSpec((None, C, HW), lambda i: (i, 0, 0)),
            pl.BlockSpec((None, C, HW), lambda i: (i, 0, 0)),
            pl.BlockSpec((2 * hidden, C), lambda i: (0, 0)),
            pl.BlockSpec((9, 2 * hidden, 1), lambda i: (0, 0, 0)),
            pl.BlockSpec((C, hidden), lambda i: (0, 0)),
        ],
        out_specs=pl.BlockSpec((None, C, HW), lambda i: (i, 0, 0)),
        compiler_params=pltpu.CompilerParams(
            dimension_semantics=("parallel",),
            vmem_limit_bytes=_vmem_limit_bytes()),
    )(z, xres, p["ffn_in_w"].astype(jnp.bfloat16), dw9,
      p["ffn_out_w"].astype(jnp.bfloat16))


# ----------------------------------------------------------------------------
# Full TransformerBlock
# ----------------------------------------------------------------------------
@functools.partial(jax.jit, static_argnums=(2,))
def transformer_block(x, p, num_heads):
    B, C, H, W = x.shape
    HW = H * W
    xf = x.reshape(B, C, HW)     # NCHW -> (B, C, HW): channels on sublanes, HW on lanes

    # --- x = x + attn(norm1(x)) ---
    z1 = _norm_and_shuffle(xf, p["ln1_w"], p["ln1_b"])
    xf = attention_branch(z1, xf, p, num_heads, H, W)

    # --- x = x + ffn(norm2(x)) ---
    z2 = _norm_and_shuffle(xf, p["ln2_w"], p["ln2_b"])
    xf = ffn_branch(z2, xf, p, H, W)

    return xf.reshape(B, C, H, W)


# ----------------------------------------------------------------------------
# Parameters (deterministic)
# ----------------------------------------------------------------------------
def init_params(key, dim, num_heads, expand_factor=4):
    hidden = int(dim * expand_factor)
    ks = jax.random.split(key, 6)

    def w(k, shape, fan_in):
        return (jax.random.normal(k, shape, jnp.float32) / np.sqrt(fan_in)).astype(jnp.float32)

    return {
        "ln1_w": jnp.ones((dim,), jnp.float32),
        "ln1_b": jnp.zeros((dim,), jnp.float32),
        "ln2_w": jnp.ones((dim,), jnp.float32),
        "ln2_b": jnp.zeros((dim,), jnp.float32),
        "temperature": jnp.ones((num_heads,), jnp.float32),
        "qkv_w": w(ks[0], (3 * dim, dim), dim),          # Conv2d(dim, 3*dim, 1): (out, in)
        "qkv_dw_w": w(ks[1], (3 * dim, 9), 9),           # depthwise taps (channel, ky*3+kx)
        "proj_w": w(ks[2], (dim, dim), dim),
        "ffn_in_w": w(ks[3], (2 * hidden, dim), dim),
        "ffn_dw_w": w(ks[4], (2 * hidden, 9), 9),
        "ffn_out_w": w(ks[5], (dim, hidden), hidden),
    }


# ----------------------------------------------------------------------------
# Pure-JAX reference (mirrors the PyTorch module, incl. the to_4d plain-reshape quirk)
# ----------------------------------------------------------------------------
def _gelu_tanh(x):
    c0 = 0.7978845608028654
    return 0.5 * x * (1.0 + jnp.tanh(c0 * (x + 0.044715 * x ** 3)))


def ref_transformer_block(x, p, num_heads):
    B, C, H, W = x.shape
    HW = H * W

    def ln(x4, w, b):
        x3 = x4.reshape(B, C, HW).transpose(0, 2, 1)          # to_3d
        mu = x3.mean(-1, keepdims=True)
        var = ((x3 - mu) ** 2).mean(-1, keepdims=True)
        y3 = (x3 - mu) / jnp.sqrt(var + 1e-5) * w + b
        return y3.reshape(B, C, H, W)                         # to_4d (plain reshape)

    def conv1x1(x4, w):                                       # w: (Cout, Cin)
        return jnp.einsum("oc,bchw->bohw", w, x4, precision="highest")

    def dwconv(x4, w):                                        # w: (Cbig, 9)
        xp = jnp.pad(x4, ((0, 0), (0, 0), (1, 1), (1, 1)))
        out = 0.0
        for ky in range(3):
            for kx in range(3):
                out = out + xp[:, :, ky:ky + H, kx:kx + W] * w[:, ky * 3 + kx][None, :, None, None]
        return out

    def attn(x4):
        qkv = dwconv(conv1x1(x4, p["qkv_w"]), p["qkv_dw_w"])
        q, k, v = jnp.split(qkv, 3, axis=1)
        d = C // num_heads
        q = q.reshape(B, num_heads, d, HW)
        k = k.reshape(B, num_heads, d, HW)
        v = v.reshape(B, num_heads, d, HW)
        q = q / jnp.maximum(jnp.linalg.norm(q, axis=-1, keepdims=True), 1e-12)
        k = k / jnp.maximum(jnp.linalg.norm(k, axis=-1, keepdims=True), 1e-12)
        score = jnp.einsum("bhds,bhes->bhde", q, k, precision="highest")
        score = score * p["temperature"][None, :, None, None]
        score = jax.nn.softmax(score, axis=-1)
        out = jnp.einsum("bhde,bhes->bhds", score, v, precision="highest")
        return conv1x1(out.reshape(B, C, H, W), p["proj_w"])

    def ffn(x4):
        h2 = dwconv(conv1x1(x4, p["ffn_in_w"]), p["ffn_dw_w"])
        x1, x2 = jnp.split(h2, 2, axis=1)
        return conv1x1(_gelu_tanh(x1) * x2, p["ffn_out_w"])

    x = x + attn(ln(x, p["ln1_w"], p["ln1_b"]))
    x = x + ffn(ln(x, p["ln2_w"], p["ln2_b"]))
    return x


# ----------------------------------------------------------------------------
# main
# ----------------------------------------------------------------------------
if __name__ == "__main__":
    B, dim, H, W = 2, 16, 16, 16
    num_heads = 2

    key = jax.random.PRNGKey(0)
    kx, kp = jax.random.split(key)
    x = jax.random.normal(kx, (B, dim, H, W), jnp.float32)    # NCHW, like PyTorch
    params = init_params(kp, dim, num_heads)

    _pltpu_roll_like_jnp()        # prime the roll-direction probe outside of jit tracing

    out = jax.block_until_ready(transformer_block(x, params, num_heads))

    ref = ref_transformer_block(x, params, num_heads)
    assert out.shape == x.shape and out.dtype == x.dtype
    # Tolerance accounts for bf16 MXU operands / approx reciprocal in the kernels vs
    # the f32 reference.
    np.testing.assert_allclose(np.asarray(out), np.asarray(ref), rtol=5e-2, atol=5e-2)

    print("KERNEL_OK")
</pallas_src>

<mosaic_0001>
module attributes {stable_mosaic.version = 11 : i64} {
  func.func @_roll_probe_kernel(%arg0: memref<8x128xf32, #tpu.memory_space<vmem>>, %arg1: memref<8x128xf32, #tpu.memory_space<vmem>>) attributes {dimension_semantics = [], scalar_prefetch = 0 : i64, scratch_operands = 0 : i64, tpu.core_type = #tpu.core_type<tc>} {
    %c0 = arith.constant 0 : index
    %c0_0 = arith.constant 0 : index
    %0 = vector.load %arg0[%c0, %c0_0] : memref<8x128xf32, #tpu.memory_space<vmem>>, vector<8x128xf32>
    %c1_i32 = arith.constant 1 : i32
    %1 = tpu.dynamic_rotate %0 by %c1_i32 dim 1 : vector<8x128xf32>, i32 -> vector<8x128xf32>
    %c0_1 = arith.constant 0 : index
    %c0_2 = arith.constant 0 : index
    %2 = vector.load %arg1[%c0_1, %c0_2] : memref<8x128xf32, #tpu.memory_space<vmem>>, vector<8x128xf32>
    tpu.vector_store %arg1[%c0_1, %c0_2], %1 {strides = array<i32>} : memref<8x128xf32, #tpu.memory_space<vmem>>, vector<8x128xf32>,
    return
  }
}

</mosaic_0001>

<llo_original>
// kernel: tpu_custom_call.1
$region0: #{tpu_custom_call.1}
  #allocation0 [shape = 'u32[]', space=smem, size = 0x4, offset = 0x4, fixed_abs, tag = 'smem constant byte address 0x4 - core index']
  #allocation1 [shape = 'u32[144,128]{1,0:T(1,128)}', space=vmem, size = 0x12000, scoped, tag = 'internal scratch']
  %s0 = inlined_call_operand.hbm [shape: f32[8,128], index: 0, kind: input, shape index: {}]
  %s1 = inlined_call_operand.hbm [shape: f32[8,128], index: 1, kind: output, shape index: {}]
  %s2 = sld [smem:[#allocation0]]
  $region18: #{tpu_custom_call.1} parent=0
    _
  %s4 = ssub.s32 1, %s2
  %s5 = scalar_select 0, %s4, %s2
  $region1: #{tpu_custom_call.1} parent=0
    #allocation2 [shape = 'u8[4096]{0}', space=vmem, size = 0x1000, scoped, tag = 'input window, operand 0, single buffered']
    #allocation3 [shape = 's32[1]{0}', space=sflag, size = 0x4, scoped, tag = 'scoped memory for tpu_custom_call.1']
    #allocation4 [shape = 's32[1]{0}', space=sflag, size = 0x4, scoped, tag = 'scoped memory for tpu_custom_call.1']
    #allocation5 [shape = 'u8[4096]{0}', space=vmem, size = 0x1000, scoped, tag = 'output window, operand 0, single buffered']
    %6 = vsyncpa [#allocation3], 0
    %7 = vsyncpa [#allocation4], 0
    // Predicated region
    $region2: #{tpu_custom_call.1} parent=1 // pred_check
      _
    $region3: #{tpu_custom_call.1} parent=1 // pred_check_branch
      %9 = sbr.rel (0) target = $region5
    $region4: #{tpu_custom_call.1} parent=1 // pred_region
      %s11 = ssub.s32 128, 128
      %12 = vsyncadd [#allocation3], %s11
      %s14 = sshll.u32 [#allocation2], 4
      %s15 = int_to_ptr.vmem [resolvable:$true] %s14
      %17 = dma.hbm_to_vmem [thread:$0]  %s0, 128, %s15, [#allocation3]
    $region5: #{tpu_custom_call.1} parent=1 // pred_fallthru
      _
    // Predicated region
    $region6: #{tpu_custom_call.1} parent=1 // pred_check
      _
    $region7: #{tpu_custom_call.1} parent=1 // pred_check_branch
      %19 = sbr.rel (0) target = $region9
    $region8: #{tpu_custom_call.1} parent=1 // pred_region
      %20 = dma.done [#allocation3], 128
    $region9: #{tpu_custom_call.1} parent=1 // pred_fallthru
      _
    %v21 = vld [vmem:[#allocation2] sm:$0xff]
    %22 = vrot.lane.b32.xlu0 %v21, 1
    %v23 = vpop.permute.xlu0 %22
    %24 = vst [vmem:[#allocation5] sm:$0xff] %v23
    // Predicated region
    $region10: #{tpu_custom_call.1} parent=1 // pred_check
      _
    $region11: #{tpu_custom_call.1} parent=1 // pred_check_branch
      %26 = sbr.rel (0) target = $region13
    $region12: #{tpu_custom_call.1} parent=1 // pred_region
      %s28 = ssub.s32 128, 128
      %29 = vsyncadd [#allocation4], %s28
      %s31 = sshll.u32 [#allocation5], 4
      %s32 = int_to_ptr.vmem [resolvable:$true] %s31
      %34 = dma.vmem_to_hbm [thread:$0]  %s32, 128, %s1, [#allocation4]
    $region13: #{tpu_custom_call.1} parent=1 // pred_fallthru
      _
    // Predicated region
    $region14: #{tpu_custom_call.1} parent=1 // pred_check
      _
    $region15: #{tpu_custom_call.1} parent=1 // pred_check_branch
      %36 = sbr.rel (0) target = $region17
    $region16: #{tpu_custom_call.1} parent=1 // pred_region
      %37 = dma.done [#allocation4], 128
    $region17: #{tpu_custom_call.1} parent=1 // pred_fallthru
      _
    %38 = vsyncpa [#allocation3], 1
    %39 = vsyncpa [#allocation4], 1

</llo_original>
